<compile_context>
chip_gen: v7x
topology: tpu7x:2x2x1
jax: 0.10.0
libtpu: 0.0.40
codegen_flags: <defaults>
</compile_context>

<pallas_src>
import functools

import jax
import jax.numpy as jnp
from jax import lax
from jax.experimental import pallas as pl
from jax.experimental.pallas import tpu as pltpu


# ----------------------------------------------------------------------------
# Pallas kernels
# ----------------------------------------------------------------------------
def _fold_to_128(sq, tile_t):
    """Reduce (1, C, tile_t) -> (1, C, 128) with log2 halving adds.

    tile_t is a power-of-two multiple of 128, so every slice boundary stays a
    multiple of 128 (vreg-aligned lane slices -> pure VPU adds, no relayout,
    no XLU cross-lane reduce, no big unroll).
    """
    w = tile_t
    while w > 128:
        h = w // 2
        sq = sq[:, :, :h] + sq[:, :, h:w]
        w = h
    return sq


def _vdl_v_kernel(scal_ref, mo_ref, x0_ref, nz_ref, out_ref, *, valid_t, tile_t):
    """v-prediction: accumulate (model_output - (a*noise - s*x0))^2.

    scal_ref        : SMEM f32[2, B]  rows = (sqrt_ac, sqrt_1m_ac)
    mo/x0/nz_ref    : VMEM [1, C, tile_t] in the NATIVE input dtype
    out_ref         : VMEM f32[1, C, 128] resident per-(batch, chunk) partial sum
    """
    b = pl.program_id(0)
    a = scal_ref[0, b]          # sqrt(alphas_cumprod[t_b])
    s = scal_ref[1, b]          # sqrt(1 - alphas_cumprod[t_b])

    @pl.when(pl.program_id(2) == 0)
    def _():
        out_ref[...] = jnp.zeros_like(out_ref)

    # Global start of this tile along T (chunk-major over the time tiles).
    t0 = (pl.program_id(1) * pl.num_programs(2) + pl.program_id(2)) * tile_t

    mo = mo_ref[...].astype(jnp.float32)
    x0 = x0_ref[...].astype(jnp.float32)
    nz = nz_ref[...].astype(jnp.float32)
    d = mo - (a * nz - s * x0)
    sq = d * d

    # Mask out-of-range time columns: ragged last tile and any clamped
    # (over-provisioned) chunk steps contribute exactly zero.
    tidx = t0 + lax.broadcasted_iota(jnp.int32, sq.shape, 2)
    sq = jnp.where(tidx < valid_t, sq, 0.0)

    out_ref[...] += _fold_to_128(sq, tile_t)


def _vdl_eps_kernel(mo_ref, x0_ref, out_ref, *, valid_t, tile_t):
    """epsilon mode per the module's forward: MSE(model_output, target=x0).

    `noise` is never used in this mode, so it is not streamed at all
    (2 input arrays instead of 3 -> ~1.5x fewer HBM bytes).
    """
    @pl.when(pl.program_id(2) == 0)
    def _():
        out_ref[...] = jnp.zeros_like(out_ref)

    t0 = (pl.program_id(1) * pl.num_programs(2) + pl.program_id(2)) * tile_t

    d = mo_ref[...].astype(jnp.float32) - x0_ref[...].astype(jnp.float32)
    sq = d * d
    tidx = t0 + lax.broadcasted_iota(jnp.int32, sq.shape, 2)
    sq = jnp.where(tidx < valid_t, sq, 0.0)

    out_ref[...] += _fold_to_128(sq, tile_t)


# ----------------------------------------------------------------------------
# Wrapper
# ----------------------------------------------------------------------------
def _vmem_limit_bytes():
    """Generation-aware scoped-VMEM limit (conservative fallback = 32 MiB)."""
    phys = None
    try:
        info = pltpu.get_tpu_info()
        phys = getattr(info, "vmem_capacity_bytes", None)
    except Exception:
        phys = None
    if phys is not None and phys >= 100 * 1024 * 1024:
        return 64 * 1024 * 1024        # v5e / v6e: 128 MiB physical per TC
    return 32 * 1024 * 1024            # v7x (64 MiB physical) or unknown


def _cdiv(a, b):
    return -(-a // b)


@functools.partial(jax.jit,
                   static_argnames=("prediction_type", "snr_gamma", "tile_t"))
def vocal_diffusion_loss(model_output, target, timesteps, noise,
                         alphas_cumprod, *, prediction_type="v",
                         snr_gamma=5.0, tile_t=None):
    """Reproduces VocalDiffusionLoss.forward.

    model_output, target, noise : [B, C, T]  (any float dtype; streamed natively)
    timesteps                   : i32[B]
    noise                       : explicit stand-in for torch.randn_like(x0)
    alphas_cumprod              : f32[num_train_timesteps]
    tile_t                      : optional time-tile override (snapped to a
                                  power-of-two multiple of 128)
    """
    B, C, T = model_output.shape
    num_steps = alphas_cumprod.shape[0]

    # ---- per-batch scalar glue (compute_snr / snr weight), as in the module --
    t = jnp.clip(timesteps, 0, num_steps - 1)
    ac = alphas_cumprod[t].astype(jnp.float32)            # f32[B]
    sqrt_ac = jnp.sqrt(ac)
    sqrt_1m_ac = jnp.sqrt(1.0 - ac)
    snr = sqrt_ac / sqrt_1m_ac                             # exactly as compute_snr
    snr_weight = jnp.minimum(snr, jnp.full_like(snr, snr_gamma)) / snr

    # ---- tiling (no padding, no wrapper-side copies) -------------------------
    in_bytes = jnp.dtype(model_output.dtype).itemsize
    num_streams = 3 if prediction_type == "v" else 2
    vmem_limit = _vmem_limit_bytes()

    if tile_t is None:
        # per-block-element VMEM cost: double-buffered native inputs + ~5 f32
        # block-sized temporaries inside the kernel body.
        per_elem = 2 * num_streams * in_bytes + 5 * 4
        cap_elems = max(128, int(0.6 * vmem_limit) // (per_elem * C))
        tt = 128
        while tt * 2 <= cap_elems and tt < T and tt < 65536:
            tt *= 2
        tile_t = tt
    else:
        # snap to a power-of-two multiple of 128 (required by the in-kernel fold)
        k = max(1, _cdiv(int(tile_t), 128))
        p = 1
        while p < k:
            p *= 2
        tile_t = 128 * p

    n_tt = _cdiv(T, tile_t)                  # time tiles (last one may be ragged)
    # Split the time reduction into independent partial-sum chunks so both
    # v7x TensorCores have work even at small / odd B.
    n_chunks = max(1, min(n_tt, 8 // max(B, 1)))
    n_inner = _cdiv(n_tt, n_chunks)
    n_chunks = _cdiv(n_tt, n_inner)

    grid = (B, n_chunks, n_inner)

    def in_idx(b, c, i):
        # clamp so over-provisioned chunk steps stay in-bounds (they are fully
        # masked out in-kernel and contribute zero).
        return (b, 0, jnp.minimum(c * n_inner + i, n_tt - 1))

    blk = pl.BlockSpec((1, C, tile_t), in_idx)
    # Output block index constant across the inner ("arbitrary") axis ->
    # resident (1, C, 128) accumulator per (batch, chunk).
    out_spec = pl.BlockSpec((1, C, 128), lambda b, c, i: (b * n_chunks + c, 0, 0))
    out_shape = jax.ShapeDtypeStruct((B * n_chunks, C, 128), jnp.float32)
    cparams = pltpu.CompilerParams(
        dimension_semantics=("parallel", "parallel", "arbitrary"),
        vmem_limit_bytes=vmem_limit)

    if prediction_type == "v":
        scalars = jnp.stack([sqrt_ac, sqrt_1m_ac], axis=0)      # f32[2, B]
        kernel = functools.partial(_vdl_v_kernel, valid_t=T, tile_t=tile_t)
        partial_sq = pl.pallas_call(
            kernel,
            out_shape=out_shape,
            grid_spec=pltpu.PrefetchScalarGridSpec(
                num_scalar_prefetch=0,
                grid=grid,
                in_specs=[
                    pl.BlockSpec(memory_space=pltpu.MemorySpace.SMEM),  # scalars
                    blk,                                                # model_output
                    blk,                                                # target (x0)
                    blk,                                                # noise
                ],
                out_specs=out_spec),
            compiler_params=cparams,
        )(scalars, model_output, target, noise)
    elif prediction_type == "epsilon":
        kernel = functools.partial(_vdl_eps_kernel, valid_t=T, tile_t=tile_t)
        partial_sq = pl.pallas_call(
            kernel,
            out_shape=out_shape,
            grid_spec=pltpu.PrefetchScalarGridSpec(
                num_scalar_prefetch=0,
                grid=grid,
                in_specs=[blk, blk],
                out_specs=out_spec),
            compiler_params=cparams,
        )(model_output, target)
    else:
        raise ValueError(f"unknown prediction_type: {prediction_type}")

    # Tiny epilogue: per-(batch, chunk) 128-wide partial sums -> per-batch sum
    # -> SNR weighting -> global mean over B*C*T elements.
    per_batch = partial_sq.reshape(B, -1).sum(axis=1)             # f32[B]
    return jnp.sum(per_batch * snr_weight) / jnp.float32(B * C * T)


# ----------------------------------------------------------------------------
# Deterministic DDPM linear-beta scheduler (stand-in for noise_scheduler)
# ----------------------------------------------------------------------------
def make_alphas_cumprod(num_train_timesteps=1000, beta_start=1e-4, beta_end=2e-2):
    betas = jnp.linspace(beta_start, beta_end, num_train_timesteps,
                         dtype=jnp.float32)
    return jnp.cumprod(1.0 - betas)


# ----------------------------------------------------------------------------
# Pure-JAX reference for a sanity check
# ----------------------------------------------------------------------------
def _reference(model_output, target, timesteps, noise, alphas_cumprod,
               prediction_type="v", snr_gamma=5.0):
    t = jnp.clip(timesteps, 0, alphas_cumprod.shape[0] - 1)
    ac = alphas_cumprod[t]
    sqrt_ac = jnp.sqrt(ac)
    sqrt_1m = jnp.sqrt(1.0 - ac)
    snr = sqrt_ac / sqrt_1m
    if prediction_type == "v":
        v_target = (sqrt_ac[:, None, None] * noise
                    - sqrt_1m[:, None, None] * target)
        loss = (model_output - v_target) ** 2
    else:
        loss = (model_output - target) ** 2
    snr_w = jnp.minimum(snr, jnp.full_like(snr, snr_gamma)) / snr
    return jnp.mean(loss * snr_w[:, None, None])


if __name__ == "__main__":
    alphas_cumprod = make_alphas_cumprod(1000)

    def run_case(B, C, T, prediction_type, tile_t=None,
                 dtype=jnp.float32, rtol=1e-5):
        key = jax.random.PRNGKey(0)
        k_mo, k_x0, k_t, k_n = jax.random.split(key, 4)
        mo = jax.random.normal(k_mo, (B, C, T), dtype=jnp.float32).astype(dtype)
        x0 = jax.random.normal(k_x0, (B, C, T), dtype=jnp.float32).astype(dtype)
        ts = jax.random.randint(k_t, (B,), 0, 1000, dtype=jnp.int32)
        # torch.randn_like(x0) drawn deterministically here and fed explicitly
        nz = jax.random.normal(k_n, (B, C, T), dtype=jnp.float32).astype(dtype)

        loss = vocal_diffusion_loss(mo, x0, ts, nz, alphas_cumprod,
                                    prediction_type=prediction_type,
                                    snr_gamma=5.0, tile_t=tile_t)
        loss = jax.block_until_ready(loss)
        ref = _reference(mo.astype(jnp.float32), x0.astype(jnp.float32), ts,
                         nz.astype(jnp.float32), alphas_cumprod,
                         prediction_type=prediction_type, snr_gamma=5.0)
        assert jnp.allclose(loss, ref, rtol=rtol, atol=1e-6), \
            (prediction_type, B, C, T, dtype, float(loss), float(ref))

    run_case(2, 8, 384, "v", tile_t=128)          # multi-tile, multi-chunk path
    run_case(2, 8, 384, "epsilon", tile_t=128)    # 2-input kernel (noise dropped)
    run_case(2, 5, 200, "v")                      # ragged C and T, auto tile size
    run_case(3, 8, 640, "v", tile_t=128,          # odd B, clamped chunk steps,
             dtype=jnp.bfloat16, rtol=1e-4)       # native bf16 streaming

    print("KERNEL_OK")
</pallas_src>

<mosaic_0001>
module attributes {stable_mosaic.version = 11 : i64} {
  func.func @_vdl_v_kernel(%arg0: i32, %arg1: i32, %arg2: i32, %arg3: memref<2x2xf32, #tpu.memory_space<smem>>, %arg4: memref<1x8x128xf32, #tpu.memory_space<vmem>>, %arg5: memref<1x8x128xf32, #tpu.memory_space<vmem>>, %arg6: memref<1x8x128xf32, #tpu.memory_space<vmem>>, %arg7: memref<1x8x128xf32, #tpu.memory_space<vmem>>) attributes {dimension_semantics = [#tpu.dimension_semantics<parallel>, #tpu.dimension_semantics<parallel>, #tpu.dimension_semantics<arbitrary>], iteration_bounds = array<i64: 2, 3, 1>, scalar_prefetch = 0 : i64, scratch_operands = 0 : i64, tpu.core_type = #tpu.core_type<tc>, window_params = [{transform_indices = @transform_0, window_bounds = array<i64: 2, 2>}, {transform_indices = @transform_1, window_bounds = array<i64: 1, 8, 128>}, {transform_indices = @transform_2, window_bounds = array<i64: 1, 8, 128>}, {transform_indices = @transform_3, window_bounds = array<i64: 1, 8, 128>}, {transform_indices = @transform_4, window_bounds = array<i64: 1, 8, 128>}]} {
    %c0 = arith.constant 0 : index
    %0 = arith.index_cast %arg0 : i32 to index
    %1 = memref.load %arg3[%c0, %0] : memref<2x2xf32, #tpu.memory_space<smem>>
    %c1 = arith.constant 1 : index
    %2 = arith.index_cast %arg0 : i32 to index
    %3 = memref.load %arg3[%c1, %2] : memref<2x2xf32, #tpu.memory_space<smem>>
    %c0_i32 = arith.constant 0 : i32
    %4 = arith.cmpi eq, %arg2, %c0_i32 : i32
    %5 = arith.extui %4 : i1 to i32
    %c0_i32_0 = arith.constant 0 : i32
    %6 = arith.cmpi ne, %5, %c0_i32_0 : i32
    scf.if %6 {
      %cst_16 = arith.constant 0.000000e+00 : f32
      %30 = vector.broadcast %cst_16 : f32 to vector<1x8x128xf32>
      %c0_17 = arith.constant 0 : index
      %c0_18 = arith.constant 0 : index
      %c0_19 = arith.constant 0 : index
      %31 = vector.load %arg7[%c0_17, %c0_18, %c0_19] : memref<1x8x128xf32, #tpu.memory_space<vmem>>, vector<1x8x128xf32>
      tpu.vector_store %arg7[%c0_17, %c0_18, %c0_19], %30 {strides = array<i32>} : memref<1x8x128xf32, #tpu.memory_space<vmem>>, vector<1x8x128xf32>,
    } else {
    }
    %c1_i32 = arith.constant 1 : i32
    %7 = arith.muli %arg1, %c1_i32 : i32
    %8 = arith.addi %7, %arg2 : i32
    %c128_i32 = arith.constant 128 : i32
    %9 = arith.muli %8, %c128_i32 : i32
    %c0_1 = arith.constant 0 : index
    %c0_2 = arith.constant 0 : index
    %c0_3 = arith.constant 0 : index
    %10 = vector.load %arg4[%c0_1, %c0_2, %c0_3] : memref<1x8x128xf32, #tpu.memory_space<vmem>>, vector<1x8x128xf32>
    %c0_4 = arith.constant 0 : index
    %c0_5 = arith.constant 0 : index
    %c0_6 = arith.constant 0 : index
    %11 = vector.load %arg5[%c0_4, %c0_5, %c0_6] : memref<1x8x128xf32, #tpu.memory_space<vmem>>, vector<1x8x128xf32>
    %c0_7 = arith.constant 0 : index
    %c0_8 = arith.constant 0 : index
    %c0_9 = arith.constant 0 : index
    %12 = vector.load %arg6[%c0_7, %c0_8, %c0_9] : memref<1x8x128xf32, #tpu.memory_space<vmem>>, vector<1x8x128xf32>
    %13 = vector.broadcast %1 : f32 to vector<1x8x128xf32>
    %14 = arith.mulf %13, %12 : vector<1x8x128xf32>
    %15 = vector.broadcast %3 : f32 to vector<1x8x128xf32>
    %16 = arith.mulf %15, %11 : vector<1x8x128xf32>
    %17 = arith.subf %14, %16 : vector<1x8x128xf32>
    %18 = arith.subf %10, %17 : vector<1x8x128xf32>
    %19 = arith.mulf %18, %18 : vector<1x8x128xf32>
    %20 = tpu.iota {dimensions = array<i32: 2>} : vector<1x8x128xi32>
    %21 = vector.broadcast %9 : i32 to vector<1x8x128xi32>
    %22 = arith.addi %21, %20 : vector<1x8x128xi32>
    %c384_i32 = arith.constant 384 : i32
    %23 = vector.broadcast %c384_i32 : i32 to vector<1x8x128xi32>
    %24 = arith.cmpi slt, %22, %23 : vector<1x8x128xi32>
    %cst = arith.constant 0.000000e+00 : f32
    %25 = vector.broadcast %cst : f32 to vector<1x8x128xf32>
    %26 = arith.select %24, %19, %25 : vector<1x8x128xi1>, vector<1x8x128xf32>
    %c0_10 = arith.constant 0 : index
    %c0_11 = arith.constant 0 : index
    %c0_12 = arith.constant 0 : index
    %27 = vector.load %arg7[%c0_10, %c0_11, %c0_12] : memref<1x8x128xf32, #tpu.memory_space<vmem>>, vector<1x8x128xf32>
    %28 = arith.addf %27, %26 : vector<1x8x128xf32>
    %c0_13 = arith.constant 0 : index
    %c0_14 = arith.constant 0 : index
    %c0_15 = arith.constant 0 : index
    %29 = vector.load %arg7[%c0_13, %c0_14, %c0_15] : memref<1x8x128xf32, #tpu.memory_space<vmem>>, vector<1x8x128xf32>
    tpu.vector_store %arg7[%c0_13, %c0_14, %c0_15], %28 {strides = array<i32>} : memref<1x8x128xf32, #tpu.memory_space<vmem>>, vector<1x8x128xf32>,
    return
  }
  func.func @transform_0(%arg0: i32, %arg1: i32, %arg2: i32) -> (i32, i32) {
    %c0_i32 = arith.constant 0 : i32
    %c0_i32_0 = arith.constant 0 : i32
    %c0_i32_1 = arith.constant 0 : i32
    return %c0_i32, %c0_i32_0 : i32, i32
  }
  func.func @transform_1(%arg0: i32, %arg1: i32, %arg2: i32) -> (i32, i32, i32) {
    %c1_i32 = arith.constant 1 : i32
    %0 = arith.muli %arg1, %c1_i32 : i32
    %1 = arith.addi %0, %arg2 : i32
    %c2_i32 = arith.constant 2 : i32
    %2 = arith.minsi %1, %c2_i32 : i32
    %c0_i32 = arith.constant 0 : i32
    %c0_i32_0 = arith.constant 0 : i32
    return %arg0, %c0_i32, %2 : i32, i32, i32
  }
  func.func @transform_2(%arg0: i32, %arg1: i32, %arg2: i32) -> (i32, i32, i32) {
    %c1_i32 = arith.constant 1 : i32
    %0 = arith.muli %arg1, %c1_i32 : i32
    %1 = arith.addi %0, %arg2 : i32
    %c2_i32 = arith.constant 2 : i32
    %2 = arith.minsi %1, %c2_i32 : i32
    %c0_i32 = arith.constant 0 : i32
    %c0_i32_0 = arith.constant 0 : i32
    return %arg0, %c0_i32, %2 : i32, i32, i32
  }
  func.func @transform_3(%arg0: i32, %arg1: i32, %arg2: i32) -> (i32, i32, i32) {
    %c1_i32 = arith.constant 1 : i32
    %0 = arith.muli %arg1, %c1_i32 : i32
    %1 = arith.addi %0, %arg2 : i32
    %c2_i32 = arith.constant 2 : i32
    %2 = arith.minsi %1, %c2_i32 : i32
    %c0_i32 = arith.constant 0 : i32
    %c0_i32_0 = arith.constant 0 : i32
    return %arg0, %c0_i32, %2 : i32, i32, i32
  }
  func.func @transform_4(%arg0: i32, %arg1: i32, %arg2: i32) -> (i32, i32, i32) {
    %c3_i32 = arith.constant 3 : i32
    %0 = arith.muli %arg0, %c3_i32 : i32
    %1 = arith.addi %0, %arg1 : i32
    %c0_i32 = arith.constant 0 : i32
    %c0_i32_0 = arith.constant 0 : i32
    %c0_i32_1 = arith.constant 0 : i32
    return %1, %c0_i32, %c0_i32_0 : i32, i32, i32
  }
}

</mosaic_0001>

<llo_original>
// kernel: vocal_diffusion_loss.1
$region0: #{vocal_diffusion_loss.1}
  #allocation0 [shape = 'u32[]', space=smem, size = 0x4, offset = 0x4, fixed_abs, tag = 'smem constant byte address 0x4 - core index']
  #allocation1 [shape = 'u32[144,128]{1,0:T(1,128)}', space=vmem, size = 0x12000, scoped, tag = 'internal scratch']
  %s0 = inlined_call_operand.vmem [shape: f32[2,2], index: 0, kind: input, shape index: {}]
  %s1 = inlined_call_operand.vmem [shape: f32[2,8,384], index: 1, kind: input, shape index: {}]
  %s2 = inlined_call_operand.vmem [shape: f32[2,8,384], index: 2, kind: input, shape index: {}]
  %s3 = inlined_call_operand.vmem [shape: f32[2,8,384], index: 3, kind: input, shape index: {}]
  %s4 = inlined_call_operand.vmem [shape: f32[6,8,128], index: 4, kind: output, shape index: {}]
  %s5 = sld [smem:[#allocation0]]
  $region57: #{vocal_diffusion_loss.1} parent=0
    _
  %s7 = ssub.s32 1, %s5
  %s8 = scalar_select 0, %s7, %s5
  $region1: #{vocal_diffusion_loss.1} parent=0
    #allocation2 [shape = 'u8[1024]{0}', space=smem, size = 0x400, scoped, tag = 'input window, operand 0, single buffered']
    #allocation3 [shape = 's32[2]{0}', space=sflag, size = 0x8, scoped, tag = 'scoped memory for vocal_diffusion_loss.1']
    %9 = vsyncpa [#allocation3], 0
    loop: start=0, step=1, limit=8
    $region2: #{vocal_diffusion_loss.1} parent=1 // loop_pre_header
      _
    $region3: #{vocal_diffusion_loss.1} parent=1 // loop_header
      %s11 = sphi 0, %s15
      %p12 = scmp.ge.s32.totalorder %s11, 8
      %s18 = sphi 0, %s37
      %s19 = sphi 0, %s33
      %s20 = sphi 0, %s29
      %s21 = sphi 0, %s18
      %s22 = sphi 0, %s19
      %s23 = sphi 0, %s20
      %s24 = sphi 0, %s21
      %s25 = sphi 0, %s22
      %s26 = sphi 0, %s23
      %s38 = sphi 0, %s38
      %s40 = sphi 0, %s38
      %s41 = sphi 0, %s40
      %s55 = sphi 0, %s41
      %s69 = sphi 0, %s71
      %s72 = sphi 0, %s69
      %s73 = sphi 0, %s72
      %s89 = sphi 0, %s73
      %s103 = sphi 0, %s105
      %s106 = sphi 0, %s103
      %s107 = sphi 0, %s106
      %s123 = sphi 0, %s107
      %s137 = sphi 0, %s139
      %s140 = sphi 0, %s137
      %s141 = sphi 0, %s140
      %s157 = sphi 0, %s141
      %s167 = sphi 0, %s169
      %s170 = sphi 0, %s167
      %s171 = sphi 0, %s170
      %s187 = sphi 0, %s171
    $region4: #{vocal_diffusion_loss.1} parent=1 // loop_header_branch
      %14 = sbr.rel (%p12) target = $region8
    $region5: #{vocal_diffusion_loss.1} parent=1 // loop_body
      %s16 = ssub.s32 %s11, 1
      %s17 = ssub.s32 %s11, 2
      %s27 = sadd.s32 1, %s20
      %p28 = scmp.ge.s32.totalorder %s27, 1
      %s29 = scalar_select %p28, 0, %s27
      %s30 = sadd.s32 1, %s19
      %s31 = scalar_select %p28, %s30, %s19
      %p32 = scmp.ge.s32.totalorder %s31, 3
      %s33 = scalar_select %p32, 0, %s31
      %s34 = sadd.s32 1, %s18
      %s35 = scalar_select %p32, %s34, %s18
      %p36 = scmp.ge.s32.totalorder %s35, 2
      %s37 = scalar_select %p36, 0, %s35
      %s39 = sadd.s32 %s38, 1
      %p42 = scmp.eq.s32.totalorder %s11, 5
      %p43 = scmp.ne.s32.totalorder %s38, %s40
      %p44 = scmp.eq.s32.totalorder %s11, 0
      %p45 = por %p43, %p44
      %p46 = scmp.ne.s32.totalorder %s38, %s40
      %p47 = scmp.eq.s32.totalorder %s16, 5
      %p48 = por %p46, %p47
      %p49 = scmp.ne.s32.totalorder %s40, %s41
      %p50 = scmp.eq.s32.totalorder %s16, 0
      %p51 = por %p49, %p50
      %p52 = scmp.ne.s32.totalorder %s40, %s41
      %p53 = scmp.eq.s32.totalorder %s17, 5
      %p54 = por %p52, %p53
      %p56 = scmp.ne.s32.totalorder %s41, %s55
      %p57 = scmp.eq.s32.totalorder %s17, 0
      %p58 = por %p56, %p57
      %s59 = sadd.s32 %s19, %s20
      %p60 = scmp.lt.s32.totalorder %s59, 2
      %s61 = scalar_select %p60, %s59, 2
      %s62 = sadd.s32 %s33, %s29
      %p63 = scmp.lt.s32.totalorder %s62, 2
      %s64 = scalar_select %p63, %s62, 2
      %s65 = ssub.s32 %s18, %s37
      %s66 = ssub.s32 %s61, %s64
      %s67 = sor.u32 %s65, %s66
      %p68 = scmp.eq.s32.totalorder %s67, 0
      %s70 = sadd.s32 %s69, 1
      %s71 = scalar_select %p68, %s69, %s70
      %p74 = pneg %p68
      %p75 = scmp.eq.s32.totalorder %s11, 5
      %p76 = por %p74, %p75
      %p77 = scmp.ne.s32.totalorder %s69, %s72
      %p78 = scmp.eq.s32.totalorder %s11, 0
      %p79 = por %p77, %p78
      %p80 = scmp.ne.s32.totalorder %s69, %s72
      %p81 = scmp.eq.s32.totalorder %s16, 5
      %p82 = por %p80, %p81
      %p83 = scmp.ne.s32.totalorder %s72, %s73
      %p84 = scmp.eq.s32.totalorder %s16, 0
      %p85 = por %p83, %p84
      %p86 = scmp.ne.s32.totalorder %s72, %s73
      %p87 = scmp.eq.s32.totalorder %s17, 5
      %p88 = por %p86, %p87
      %p90 = scmp.ne.s32.totalorder %s73, %s89
      %p91 = scmp.eq.s32.totalorder %s17, 0
      %p92 = por %p90, %p91
      %s93 = sadd.s32 %s19, %s20
      %p94 = scmp.lt.s32.totalorder %s93, 2
      %s95 = scalar_select %p94, %s93, 2
      %s96 = sadd.s32 %s33, %s29
      %p97 = scmp.lt.s32.totalorder %s96, 2
      %s98 = scalar_select %p97, %s96, 2
      %s99 = ssub.s32 %s18, %s37
      %s100 = ssub.s32 %s95, %s98
      %s101 = sor.u32 %s99, %s100
      %p102 = scmp.eq.s32.totalorder %s101, 0
      %s104 = sadd.s32 %s103, 1
      %s105 = scalar_select %p102, %s103, %s104
      %p108 = pneg %p102
      %p109 = scmp.eq.s32.totalorder %s11, 5
      %p110 = por %p108, %p109
      %p111 = scmp.ne.s32.totalorder %s103, %s106
      %p112 = scmp.eq.s32.totalorder %s11, 0
      %p113 = por %p111, %p112
      %p114 = scmp.ne.s32.totalorder %s103, %s106
      %p115 = scmp.eq.s32.totalorder %s16, 5
      %p116 = por %p114, %p115
      %p117 = scmp.ne.s32.totalorder %s106, %s107
      %p118 = scmp.eq.s32.totalorder %s16, 0
      %p119 = por %p117, %p118
      %p120 = scmp.ne.s32.totalorder %s106, %s107
      %p121 = scmp.eq.s32.totalorder %s17, 5
      %p122 = por %p120, %p121
      %p124 = scmp.ne.s32.totalorder %s107, %s123
      %p125 = scmp.eq.s32.totalorder %s17, 0
      %p126 = por %p124, %p125
      %s127 = sadd.s32 %s19, %s20
      %p128 = scmp.lt.s32.totalorder %s127, 2
      %s129 = scalar_select %p128, %s127, 2
      %s130 = sadd.s32 %s33, %s29
      %p131 = scmp.lt.s32.totalorder %s130, 2
      %s132 = scalar_select %p131, %s130, 2
      %s133 = ssub.s32 %s18, %s37
      %s134 = ssub.s32 %s129, %s132
      %s135 = sor.u32 %s133, %s134
      %p136 = scmp.eq.s32.totalorder %s135, 0
      %s138 = sadd.s32 %s137, 1
      %s139 = scalar_select %p136, %s137, %s138
      %p142 = pneg %p136
      %p143 = scmp.eq.s32.totalorder %s11, 5
      %p144 = por %p142, %p143
      %p145 = scmp.ne.s32.totalorder %s137, %s140
      %p146 = scmp.eq.s32.totalorder %s11, 0
      %p147 = por %p145, %p146
      %p148 = scmp.ne.s32.totalorder %s137, %s140
      %p149 = scmp.eq.s32.totalorder %s16, 5
      %p150 = por %p148, %p149
      %p151 = scmp.ne.s32.totalorder %s140, %s141
      %p152 = scmp.eq.s32.totalorder %s16, 0
      %p153 = por %p151, %p152
      %p154 = scmp.ne.s32.totalorder %s140, %s141
      %p155 = scmp.eq.s32.totalorder %s17, 5
      %p156 = por %p154, %p155
      %p158 = scmp.ne.s32.totalorder %s141, %s157
      %p159 = scmp.eq.s32.totalorder %s17, 0
      %p160 = por %p158, %p159
      %s161 = smul.u32 %s18, 3
      %s162 = sadd.s32 %s161, %s19
      %s163 = smul.u32 %s37, 3
      %s164 = sadd.s32 %s163, %s33
      %s165 = ssub.s32 %s162, %s164
      %p166 = scmp.eq.s32.totalorder %s165, 0
      %s168 = sadd.s32 %s167, 1
      %s169 = scalar_select %p166, %s167, %s168
      %p172 = pneg %p166
      %p173 = scmp.eq.s32.totalorder %s11, 5
      %p174 = por %p172, %p173
      %p175 = scmp.ne.s32.totalorder %s167, %s170
      %p176 = scmp.eq.s32.totalorder %s11, 0
      %p177 = por %p175, %p176
      %p178 = scmp.ne.s32.totalorder %s167, %s170
      %p179 = scmp.eq.s32.totalorder %s16, 5
      %p180 = por %p178, %p179
      %p181 = scmp.ne.s32.totalorder %s170, %s171
      %p182 = scmp.eq.s32.totalorder %s16, 0
      %p183 = por %p181, %p182
      %p184 = scmp.ne.s32.totalorder %s170, %s171
      %p185 = scmp.eq.s32.totalorder %s17, 5
      %p186 = por %p184, %p185
      %p188 = scmp.ne.s32.totalorder %s171, %s187
      %p189 = scmp.eq.s32.totalorder %s17, 0
      %p190 = por %p188, %p189
      %p191 = scmp.le.s32.totalorder 1, %s11
      %p192 = scmp.lt.s32.totalorder %s11, 7
      %p193 = pnand %p191, %p192
      %p194 = pneg %p193
      // Predicated region
      $region9: #{vocal_diffusion_loss.1} parent=5 // pred_check
        _
      $region10: #{vocal_diffusion_loss.1} parent=5 // pred_check_branch
        %196 = sbr.rel (%p193) target = $region12
      $region11: #{vocal_diffusion_loss.1} parent=5 // pred_region
        %s197 = ssub.s32 %s11, 1
        // Predicated region
        $region13: #{vocal_diffusion_loss.1} parent=11 // pred_check
          %p198 = pneg %p51
        $region14: #{vocal_diffusion_loss.1} parent=11 // pred_check_branch
          %200 = sbr.rel (%p198) target = $region16
        $region15: #{vocal_diffusion_loss.1} parent=11 // pred_region
          %s202 = ssub.s32 32, 32
          %203 = vsyncadd [#allocation3], %s202
          %s205 = sshll.u32 %s0, 4
          %s206 = int_to_ptr.vmem [resolvable:$true] %s205
          %208 = dma.vmem_to_smem %s206, 32, [#allocation2], [#allocation3]
        $region16: #{vocal_diffusion_loss.1} parent=11 // pred_fallthru
          _
      $region12: #{vocal_diffusion_loss.1} parent=5 // pred_fallthru
        _
      %p209 = scmp.lt.s32.totalorder %s11, 6
      // Predicated region
      $region17: #{vocal_diffusion_loss.1} parent=5 // pred_check
        %p210 = pneg %p209
      $region18: #{vocal_diffusion_loss.1} parent=5 // pred_check_branch
        %212 = sbr.rel (%p210) target = $region20
      $region19: #{vocal_diffusion_loss.1} parent=5 // pred_region
        // Predicated region
        $region21: #{vocal_diffusion_loss.1} parent=19 // pred_check
          %p213 = pneg %p79
        $region22: #{vocal_diffusion_loss.1} parent=19 // pred_check_branch
          %215 = sbr.rel (%p213) target = $region24
        $region23: #{vocal_diffusion_loss.1} parent=19 // pred_region
          %s216 = sadd.s32 %s19, %s20
          %p217 = scmp.lt.s32.totalorder %s216, 2
          %s218 = scalar_select %p217, %s216, 2
          %p219 = scmp.lt.s32.totalorder %s18, 1
          %s220 = scalar_select %p219, %s18, 1
          %p221 = scmp.lt.s32.totalorder %s218, 2
          %s222 = scalar_select %p221, %s218, 2
          %s223 = smul.addr %s220, 3
          %s224 = sadd.s32 %s222, %s223
          %s225 = smul.addr %s224, 8
          %s226 = scalar_lea.vmem %s1, %s225
          %s227 = sadd.s32 %s19, %s20
          %p228 = scmp.lt.s32.totalorder %s227, 2
          %s229 = scalar_select %p228, %s227, 2
        $region24: #{vocal_diffusion_loss.1} parent=19 // pred_fallthru
          _
        // Predicated region
        $region25: #{vocal_diffusion_loss.1} parent=19 // pred_check
          %p230 = pneg %p113
        $region26: #{vocal_diffusion_loss.1} parent=19 // pred_check_branch
          %232 = sbr.rel (%p230) target = $region28
        $region27: #{vocal_diffusion_loss.1} parent=19 // pred_region
          %s233 = sadd.s32 %s19, %s20
          %p234 = scmp.lt.s32.totalorder %s233, 2
          %s235 = scalar_select %p234, %s233, 2
          %p236 = scmp.lt.s32.totalorder %s18, 1
          %s237 = scalar_select %p236, %s18, 1
          %p238 = scmp.lt.s32.totalorder %s235, 2
          %s239 = scalar_select %p238, %s235, 2
          %s240 = smul.addr %s237, 3
          %s241 = sadd.s32 %s239, %s240
          %s242 = smul.addr %s241, 8
          %s243 = scalar_lea.vmem %s2, %s242
          %s244 = sadd.s32 %s19, %s20
          %p245 = scmp.lt.s32.totalorder %s244, 2
          %s246 = scalar_select %p245, %s244, 2
        $region28: #{vocal_diffusion_loss.1} parent=19 // pred_fallthru
          _
        // Predicated region
        $region29: #{vocal_diffusion_loss.1} parent=19 // pred_check
          %p247 = pneg %p147
        $region30: #{vocal_diffusion_loss.1} parent=19 // pred_check_branch
          %249 = sbr.rel (%p247) target = $region32
        $region31: #{vocal_diffusion_loss.1} parent=19 // pred_region
          %s250 = sadd.s32 %s19, %s20
          %p251 = scmp.lt.s32.totalorder %s250, 2
          %s252 = scalar_select %p251, %s250, 2
          %p253 = scmp.lt.s32.totalorder %s18, 1
          %s254 = scalar_select %p253, %s18, 1
          %p255 = scmp.lt.s32.totalorder %s252, 2
          %s256 = scalar_select %p255, %s252, 2
          %s257 = smul.addr %s254, 3
          %s258 = sadd.s32 %s256, %s257
          %s259 = smul.addr %s258, 8
          %s260 = scalar_lea.vmem %s3, %s259
          %s261 = sadd.s32 %s19, %s20
          %p262 = scmp.lt.s32.totalorder %s261, 2
          %s263 = scalar_select %p262, %s261, 2
        $region32: #{vocal_diffusion_loss.1} parent=19 // pred_fallthru
          _
      $region20: #{vocal_diffusion_loss.1} parent=5 // pred_fallthru
        _
      %p264 = scmp.le.s32.totalorder 1, %s11
      %p265 = scmp.lt.s32.totalorder %s11, 7
      %p266 = pnand %p264, %p265
      %p267 = pneg %p266
      // Predicated region
      $region33: #{vocal_diffusion_loss.1} parent=5 // pred_check
        _
      $region34: #{vocal_diffusion_loss.1} parent=5 // pred_check_branch
        %269 = sbr.rel (%p266) target = $region36
      $region35: #{vocal_diffusion_loss.1} parent=5 // pred_region
        %s270 = ssub.s32 %s11, 1
        // Predicated region
        $region37: #{vocal_diffusion_loss.1} parent=35 // pred_check
          %p271 = pneg %p51
        $region38: #{vocal_diffusion_loss.1} parent=35 // pred_check_branch
          %273 = sbr.rel (%p271) target = $region40
        $region39: #{vocal_diffusion_loss.1} parent=35 // pred_region
          %274 = dma.done [#allocation3], 32
        $region40: #{vocal_diffusion_loss.1} parent=35 // pred_fallthru
          _
        %275 = sfence
        %p276 = pneg %p51
        %p277 = pneg %p48
        %s278 = sadd.s32 %s22, %s23
        %p279 = scmp.lt.s32.totalorder %s278, 2
        %s280 = scalar_select %p279, %s278, 2
        %p281 = scmp.lt.s32.totalorder %s21, 1
        %s282 = scalar_select %p281, %s21, 1
        %p283 = scmp.lt.s32.totalorder %s280, 2
        %s284 = scalar_select %p283, %s280, 2
        %s285 = smul.addr %s282, 3
        %s286 = sadd.s32 %s284, %s285
        %s287 = smul.addr %s286, 8
        %s288 = scalar_lea.vmem %s1, %s287
        %p289 = pneg %p85
        %p290 = pneg %p82
        %s291 = sadd.s32 %s22, %s23
        %p292 = scmp.lt.s32.totalorder %s291, 2
        %s293 = scalar_select %p292, %s291, 2
        %p294 = scmp.lt.s32.totalorder %s21, 1
        %s295 = scalar_select %p294, %s21, 1
        %p296 = scmp.lt.s32.totalorder %s293, 2
        %s297 = scalar_select %p296, %s293, 2
        %s298 = smul.addr %s295, 3
        %s299 = sadd.s32 %s297, %s298
        %s300 = smul.addr %s299, 8
        %s301 = scalar_lea.vmem %s2, %s300
        %p302 = pneg %p119
        %p303 = pneg %p116
        %s304 = sadd.s32 %s22, %s23
        %p305 = scmp.lt.s32.totalorder %s304, 2
        %s306 = scalar_select %p305, %s304, 2
        %p307 = scmp.lt.s32.totalorder %s21, 1
        %s308 = scalar_select %p307, %s21, 1
        %p309 = scmp.lt.s32.totalorder %s306, 2
        %s310 = scalar_select %p309, %s306, 2
        %s311 = smul.addr %s308, 3
        %s312 = sadd.s32 %s310, %s311
        %s313 = smul.addr %s312, 8
        %s314 = scalar_lea.vmem %s3, %s313
        %p315 = pneg %p153
        %p316 = pneg %p150
        %p317 = pneg %p183
        %p318 = pneg %p180
        %s319 = smul.u32 %s21, 3
        %s320 = sadd.s32 %s319, %s22
        %p321 = scmp.lt.s32.totalorder %s320, 5
        %s322 = scalar_select %p321, %s320, 5
        %s323 = smul.addr %s322, 8
        %s324 = scalar_lea.vmem %s4, %s323
        %s325 = sadd.s32 %s22, %s23
        %p326 = scmp.lt.s32.totalorder %s325, 2
        %s327 = scalar_select %p326, %s325, 2
        %p328 = scmp.lt.s32.totalorder %s21, 1
        %s329 = scalar_select %p328, %s21, 1
        %p330 = scmp.lt.s32.totalorder %s327, 2
        %s331 = scalar_select %p330, %s327, 2
        %s332 = smul.addr %s329, 3
        %s333 = sadd.s32 %s331, %s332
        %s334 = smul.addr %s333, 8
        %s335 = scalar_lea.vmem %s1, %s334
        %s336 = sadd.s32 %s22, %s23
        %p337 = scmp.lt.s32.totalorder %s336, 2
        %s338 = scalar_select %p337, %s336, 2
        %s339 = sadd.s32 %s22, %s23
        %p340 = scmp.lt.s32.totalorder %s339, 2
        %s341 = scalar_select %p340, %s339, 2
        %p342 = scmp.lt.s32.totalorder %s21, 1
        %s343 = scalar_select %p342, %s21, 1
        %p344 = scmp.lt.s32.totalorder %s341, 2
        %s345 = scalar_select %p344, %s341, 2
        %s346 = smul.addr %s343, 3
        %s347 = sadd.s32 %s345, %s346
        %s348 = smul.addr %s347, 8
        %s349 = scalar_lea.vmem %s2, %s348
        %s350 = sadd.s32 %s22, %s23
        %p351 = scmp.lt.s32.totalorder %s350, 2
        %s352 = scalar_select %p351, %s350, 2
        %s353 = sadd.s32 %s22, %s23
        %p354 = scmp.lt.s32.totalorder %s353, 2
        %s355 = scalar_select %p354, %s353, 2
        %p356 = scmp.lt.s32.totalorder %s21, 1
        %s357 = scalar_select %p356, %s21, 1
        %p358 = scmp.lt.s32.totalorder %s355, 2
        %s359 = scalar_select %p358, %s355, 2
        %s360 = smul.addr %s357, 3
        %s361 = sadd.s32 %s359, %s360
        %s362 = smul.addr %s361, 8
        %s363 = scalar_lea.vmem %s3, %s362
        %s364 = sadd.s32 %s22, %s23
        %p365 = scmp.lt.s32.totalorder %s364, 2
        %s366 = scalar_select %p365, %s364, 2
        %s367 = smul.u32 %s21, 3
        %s368 = sadd.s32 %s367, %s22
        %p369 = scmp.lt.s32.totalorder %s368, 5
        %s370 = scalar_select %p369, %s368, 5
        %s371 = smul.addr %s370, 8
        %s372 = scalar_lea.vmem %s4, %s371
        %s373 = smul.u32 %s21, 3
        %s374 = sadd.s32 %s373, %s22
        %s375 = sld [smem:[#allocation2 + %s21]]
        %s376 = sshra.s32 %s21, 7
        %s377 = sand.u32 %s21, 127
        %s378 = sadd.s32 %s376, 1
        %s379 = smul.u32 %s378, 128
        %s380 = sshra.s32 %s21, 7
        %s381 = sand.u32 %s21, 127
        %s382 = sadd.s32 %s379, %s381
        %s383 = sld [smem:[#allocation2 + %s382]]
        %p384 = scmp.eq.s32.totalorder %s23, 0
        // Predicated region
        $region41: #{vocal_diffusion_loss.1} parent=35 // pred_check
          %p385 = pneg %p384
        $region42: #{vocal_diffusion_loss.1} parent=35 // pred_check_branch
          %387 = sbr.rel (%p385) target = $region44
        $region43: #{vocal_diffusion_loss.1} parent=35 // pred_region
          %388 = vst [vmem:[%s372] sm:$0xff] 0.0
        $region44: #{vocal_diffusion_loss.1} parent=35 // pred_fallthru
          _
        %s389 = sadd.s32 %s22, %s23
        %s390 = smul.u32 %s389, 128
        %v391 = vld [vmem:[%s335] sm:$0xff]
        %v392 = vld [vmem:[%s349] sm:$0xff]
        %v393 = vld [vmem:[%s363] sm:$0xff]
        %v394 = vstv %s375
        %v395 = vmul.f32 %v394, %v393
        %v396 = vstv %s383
        %v397 = vmul.f32 %v396, %v392
        %v398 = vsub.f32 %v395, %v397
        %v399 = vsub.f32 %v391, %v398
        %v400 = vmul.f32 %v399, %v399
        %v401 = vlaneseq
        %v402 = vand.u32 %v401, 127
        %v403 = vstv %s390
        %v404 = vadd.s32 %v403, %v402
        %vm405 = vcmp.lt.s32.totalorder %v404, 384
        %v406 = vsel %vm405, %v400, 0.0
        %v407 = vld [vmem:[%s372] sm:$0xff]
        %v408 = vadd.f32 %v407, %v406
        %409 = vst [vmem:[%s372] sm:$0xff] %v408
        %s410 = smul.u32 %s21, 3
        %s411 = sadd.s32 %s410, %s22
        %p412 = scmp.lt.s32.totalorder %s411, 5
        %s413 = scalar_select %p412, %s411, 5
        %s414 = smul.addr %s413, 8
        %s415 = scalar_lea.vmem %s4, %s414
        // Predicated region
        $region45: #{vocal_diffusion_loss.1} parent=35 // pred_check
          %p416 = pneg %p180
        $region46: #{vocal_diffusion_loss.1} parent=35 // pred_check_branch
          %418 = sbr.rel (%p416) target = $region48
        $region47: #{vocal_diffusion_loss.1} parent=35 // pred_region
          %s419 = smul.u32 %s21, 3
          %s420 = sadd.s32 %s419, %s22
        $region48: #{vocal_diffusion_loss.1} parent=35 // pred_fallthru
          _
      $region36: #{vocal_diffusion_loss.1} parent=5 // pred_fallthru
        _
      %p421 = scmp.le.s32.totalorder 2, %s11
      // Predicated region
      $region49: #{vocal_diffusion_loss.1} parent=5 // pred_check
        %p422 = pneg %p421
      $region50: #{vocal_diffusion_loss.1} parent=5 // pred_check_branch
        %424 = sbr.rel (%p422) target = $region52
      $region51: #{vocal_diffusion_loss.1} parent=5 // pred_region
        %s425 = ssub.s32 %s11, 2
        // Predicated region
        $region53: #{vocal_diffusion_loss.1} parent=51 // pred_check
          %p426 = pneg %p186
        $region54: #{vocal_diffusion_loss.1} parent=51 // pred_check_branch
          %428 = sbr.rel (%p426) target = $region56
        $region55: #{vocal_diffusion_loss.1} parent=51 // pred_region
          %s429 = smul.u32 %s24, 3
          %s430 = sadd.s32 %s429, %s25
          %p431 = scmp.lt.s32.totalorder %s430, 5
          %s432 = scalar_select %p431, %s430, 5
          %s433 = smul.addr %s432, 8
          %s434 = scalar_lea.vmem %s4, %s433
        $region56: #{vocal_diffusion_loss.1} parent=51 // pred_fallthru
          _
      $region52: #{vocal_diffusion_loss.1} parent=5 // pred_fallthru
        _
    $region6: #{vocal_diffusion_loss.1} parent=1 // loop_footer
      %s15 = sadd.s32 1, %s11
    $region7: #{vocal_diffusion_loss.1} parent=1 // loop_footer_branch
      %10 = sbr.rel target = $region3
    $region8: #{vocal_diffusion_loss.1} parent=1 // loop_exit
      _
    %435 = vsyncpa [#allocation3], 1
    %s436 = scalar_lea.sflag [#allocation3], 1
    %437 = vsyncpa %s436, 1

</llo_original>
